<compile_context>
chip_gen: v5e
topology: v5e:2x2
jax: 0.10.0
libtpu: 0.0.40
codegen_flags: <defaults>
</compile_context>

<pallas_src>
import jax
import jax.numpy as jnp
from jax.experimental import pallas as pl
from jax.experimental.pallas import tpu as pltpu

D_IN = 768
D_OUT = 128


def _mlp_kernel(x_ref, w_ref, b_ref, o_ref):
    # x_ref: (bm, 768) f32  (bf16 cast done HERE so x is read from HBM once)
    # w_ref: (768, 128) bf16 (resident)   b_ref: (1, 128) f32
    # o_ref: (bm, 128) f32 (or bf16 if out_dtype=bfloat16)
    xb = x_ref[...].astype(jnp.bfloat16)          # VPU convert, hides under DMA
    acc = jnp.dot(xb, w_ref[...], preferred_element_type=jnp.float32)
    acc = acc + b_ref[...]                        # broadcast (1,128) -> (bm,128)
    o_ref[...] = jnp.maximum(acc, 0.0).astype(o_ref.dtype)


def _round_up(x, m):
    return ((x + m - 1) // m) * m


def _pick_bm(batch, cap=2048):
    # ceil(B/2) so the "parallel" grid axis has >= 2 steps and both v7x
    # TensorCores get work; rounded to the sublane granule (8) only -- M is
    # streamed through the MXU so coarser alignment just pads junk rows.
    half = -(-batch // 2)
    return max(8, min(cap, _round_up(half, 8)))


def textual_forward(all_phrase_emo_fea, w, b, *, bm=None, bm_cap=2048,
                    min_pallas_rows=256, force_pallas=False,
                    out_dtype=jnp.float32, vmem_limit_bytes=None):
    """Pallas equivalent of Textual.forward (eval mode).

    all_phrase_emo_fea: (B, 768) float32
    w: (768, 128) float32, b: (128,) float32
    returns: (B, 1, 128) out_dtype
    """
    B, d_in = all_phrase_emo_fea.shape
    assert d_in == D_IN

    # A lone memory-bound 768->128 GEMM+ReLU gives Pallas no edge over XLA's
    # fused dot at small batch; only take the kernel path when it pays off.
    if B < min_pallas_rows and not force_pallas:
        out = jnp.maximum(all_phrase_emo_fea @ w + b, 0.0).astype(out_dtype)
        return out[:, None, :]

    if bm is None:
        bm = _pick_bm(B, bm_cap)
    bm = max(8, (bm // 8) * 8)          # (8,128) tiling constraint on the M dim
    grid_m = pl.cdiv(B, bm)             # partial last block: OOB reads feed
                                        # junk rows that are masked on store.
    # NOTE: if you raise bm_cap beyond ~2048 (e.g. 8192 on v5e/v6e's 128 MiB
    # VMEM), pass vmem_limit_bytes accordingly; keep v7x (64 MiB physical,
    # 32 MiB default scoped) under ~28 MiB of double-buffered tiles.

    w_c = w.astype(jnp.bfloat16)                      # 192 KiB, stays resident
    b2d = b.reshape(1, D_OUT).astype(jnp.float32)

    cost = pl.CostEstimate(
        flops=2 * B * D_IN * D_OUT,
        transcendentals=0,
        bytes_accessed=(B * D_IN * all_phrase_emo_fea.dtype.itemsize
                        + D_IN * D_OUT * w_c.dtype.itemsize
                        + B * D_OUT * jnp.dtype(out_dtype).itemsize),
    )

    out = pl.pallas_call(
        _mlp_kernel,
        out_shape=jax.ShapeDtypeStruct((B, D_OUT), out_dtype),
        grid_spec=pl.GridSpec(
            grid=(grid_m,),
            in_specs=[
                pl.BlockSpec((bm, D_IN), lambda i: (i, 0)),      # x tile (f32)
                pl.BlockSpec((D_IN, D_OUT), lambda i: (0, 0)),   # full weight
                pl.BlockSpec((1, D_OUT), lambda i: (0, 0)),      # bias row
            ],
            out_specs=pl.BlockSpec((bm, D_OUT), lambda i: (i, 0)),
        ),
        compiler_params=pltpu.CompilerParams(
            dimension_semantics=("parallel",),
            vmem_limit_bytes=vmem_limit_bytes,
        ),
        cost_estimate=cost,
    )(all_phrase_emo_fea, w_c, b2d)

    # .unsqueeze(1) in PyTorch -> add axis 1 here (glue, plain JAX)
    return out[:, None, :]


def init_params(key):
    """Deterministic PyTorch-nn.Linear-style init for Linear(768, 128)."""
    kw, kb = jax.random.split(key)
    bound = 1.0 / jnp.sqrt(jnp.float32(D_IN))
    # PyTorch stores weight as (out, in); we keep (in, out) for x @ W.
    w = jax.random.uniform(kw, (D_IN, D_OUT), jnp.float32, -bound, bound)
    b = jax.random.uniform(kb, (D_OUT,), jnp.float32, -bound, bound)
    return w, b


def _ref_bf16(x, w, b):
    # Reference with the same bf16 operand rounding, f32 accumulation.
    xf = x.astype(jnp.bfloat16).astype(jnp.float32)
    wf = w.astype(jnp.bfloat16).astype(jnp.float32)
    return jnp.maximum(xf @ wf + b, 0.0)[:, None, :]


if __name__ == "__main__":
    root = jax.random.PRNGKey(0)
    kp, k1, k2 = jax.random.split(root, 3)
    w, b = init_params(kp)

    # Small batch, exact-multiple single-step grid (force the Pallas path).
    B = 8
    x = jax.random.normal(k1, (B, D_IN), jnp.float32)
    out = jax.block_until_ready(textual_forward(x, w, b, force_pallas=True))
    assert out.shape == (B, 1, D_OUT)
    assert jnp.allclose(out, _ref_bf16(x, w, b), atol=2e-3, rtol=2e-3)
    # Loose check against full-f32 reference (bf16 operand rounding only).
    ref_f32 = jnp.maximum(x @ w + b, 0.0)[:, None, :]
    assert jnp.allclose(out, ref_f32, atol=5e-2, rtol=5e-2)

    # Non-multiple batch: multi-step grid with a partial last tile, no padding
    # and no post-slice (Pallas masks the out-of-bounds rows on store).
    B2 = 20
    x2 = jax.random.normal(k2, (B2, D_IN), jnp.float32)
    out2 = jax.block_until_ready(
        textual_forward(x2, w, b, bm=8, force_pallas=True))
    assert out2.shape == (B2, 1, D_OUT)
    assert jnp.allclose(out2, _ref_bf16(x2, w, b), atol=2e-3, rtol=2e-3)

    print("KERNEL_OK")
</pallas_src>

<mosaic_0001>
module attributes {stable_mosaic.version = 11 : i64} {
  func.func @_mlp_kernel(%arg0: i32, %arg1: memref<8x768xf32, #tpu.memory_space<vmem>>, %arg2: memref<768x128xbf16, #tpu.memory_space<vmem>>, %arg3: memref<1x128xf32, #tpu.memory_space<vmem>>, %arg4: memref<8x128xf32, #tpu.memory_space<vmem>>) attributes {dimension_semantics = [#tpu.dimension_semantics<parallel>], iteration_bounds = array<i64: 1>, scalar_prefetch = 0 : i64, scratch_operands = 0 : i64, tpu.core_type = #tpu.core_type<tc>, window_params = [{transform_indices = @transform_0, window_bounds = array<i64: 8, 768>}, {pipeline_mode = #tpu.pipeline_mode<synchronous>, transform_indices = @transform_1, window_bounds = array<i64: 768, 128>}, {pipeline_mode = #tpu.pipeline_mode<synchronous>, transform_indices = @transform_2, window_bounds = array<i64: 1, 128>}, {transform_indices = @transform_3, window_bounds = array<i64: 8, 128>}]} {
    %c0 = arith.constant 0 : index
    %c0_0 = arith.constant 0 : index
    %0 = vector.load %arg1[%c0, %c0_0] : memref<8x768xf32, #tpu.memory_space<vmem>>, vector<8x768xf32>
    %1 = arith.truncf %0 : vector<8x768xf32> to vector<8x768xbf16>
    %c0_1 = arith.constant 0 : index
    %c0_2 = arith.constant 0 : index
    %2 = vector.load %arg2[%c0_1, %c0_2] : memref<768x128xbf16, #tpu.memory_space<vmem>>, vector<768x128xbf16>
    %cst = arith.constant dense<0.000000e+00> : vector<8x128xf32>
    %3 = tpu.matmul %1, %2, %cst {dimension_numbers = #tpu.dot_dimension_numbers<[1], [0], [0], [1], [0, 0, 1, 1], [], []>} : vector<8x768xbf16>, vector<768x128xbf16>, vector<8x128xf32> -> vector<8x128xf32>
    %c0_3 = arith.constant 0 : index
    %c0_4 = arith.constant 0 : index
    %4 = vector.load %arg3[%c0_3, %c0_4] : memref<1x128xf32, #tpu.memory_space<vmem>>, vector<1x128xf32>
    %5 = vector.broadcast %4 : vector<1x128xf32> to vector<8x128xf32>
    %6 = arith.addf %3, %5 : vector<8x128xf32>
    %cst_5 = arith.constant 0.000000e+00 : f32
    %7 = vector.broadcast %cst_5 : f32 to vector<8x128xf32>
    %8 = arith.maximumf %6, %7 : vector<8x128xf32>
    %c0_6 = arith.constant 0 : index
    %c0_7 = arith.constant 0 : index
    %9 = vector.load %arg4[%c0_6, %c0_7] : memref<8x128xf32, #tpu.memory_space<vmem>>, vector<8x128xf32>
    tpu.vector_store %arg4[%c0_6, %c0_7], %8 {strides = array<i32>} : memref<8x128xf32, #tpu.memory_space<vmem>>, vector<8x128xf32>,
    return
  }
  func.func @transform_0(%arg0: i32) -> (i32, i32) {
    %c0_i32 = arith.constant 0 : i32
    %c0_i32_0 = arith.constant 0 : i32
    return %arg0, %c0_i32 : i32, i32
  }
  func.func @transform_1(%arg0: i32) -> (i32, i32) {
    %c0_i32 = arith.constant 0 : i32
    %c0_i32_0 = arith.constant 0 : i32
    %c0_i32_1 = arith.constant 0 : i32
    return %c0_i32, %c0_i32_0 : i32, i32
  }
  func.func @transform_2(%arg0: i32) -> (i32, i32) {
    %c0_i32 = arith.constant 0 : i32
    %c0_i32_0 = arith.constant 0 : i32
    %c0_i32_1 = arith.constant 0 : i32
    return %c0_i32, %c0_i32_0 : i32, i32
  }
  func.func @transform_3(%arg0: i32) -> (i32, i32) {
    %c0_i32 = arith.constant 0 : i32
    %c0_i32_0 = arith.constant 0 : i32
    return %arg0, %c0_i32 : i32, i32
  }
}

</mosaic_0001>

<llo_original>
// kernel: tpu_custom_call.1
$region0: #{tpu_custom_call.1}
  #allocation0 [shape = 'u32[]', space=smem, size = 0x4, offset = 0x4, fixed_abs, tag = 'smem constant byte address 0x4 - core index']
  #allocation1 [shape = 'u32[72,128]{1,0:T(1,128)}', space=vmem, size = 0x9000, scoped, tag = 'internal scratch']
  %s0 = inlined_call_operand.hbm [shape: f32[8,768], index: 0, kind: input, shape index: {}]
  %s1 = inlined_call_operand.hbm [shape: bf16[768,128], index: 1, kind: input, shape index: {}]
  %s2 = inlined_call_operand.vmem [shape: f32[1,128], index: 2, kind: input, shape index: {}]
  %s3 = inlined_call_operand.hbm [shape: f32[8,128], index: 3, kind: output, shape index: {}]
  %s4 = sld [smem:[#allocation0]]
  $region30: #{tpu_custom_call.1} parent=0
    _
  %s6 = ssub.s32 1, %s4
  %s7 = scalar_select 0, %s6, %s4
  $region1: #{tpu_custom_call.1} parent=0
    #allocation2 [shape = 'u8[24576]{0}', space=vmem, size = 0x6000, scoped, tag = 'input window, operand 0, single buffered']
    #allocation3 [shape = 's32[1]{0}', space=sflag, size = 0x4, scoped, tag = 'scoped memory for tpu_custom_call.1']
    #allocation4 [shape = 's32[1]{0}', space=sflag, size = 0x4, scoped, tag = 'scoped memory for tpu_custom_call.1']
    #allocation5 [shape = 'u8[196608]{0}', space=vmem, size = 0x30000, scoped, tag = 'input window, operand 1, single buffered']
    #allocation6 [shape = 's32[1]{0}', space=sflag, size = 0x4, scoped, tag = 'scoped memory for tpu_custom_call.1']
    #allocation7 [shape = 'u8[4096]{0}', space=vmem, size = 0x1000, scoped, tag = 'output window, operand 0, single buffered']
    %8 = vsyncpa [#allocation3], 0
    %9 = vsyncpa [#allocation6], 0
    %10 = vsyncpa [#allocation4], 0
    // Predicated region
    $region2: #{tpu_custom_call.1} parent=1 // pred_check
      _
    $region3: #{tpu_custom_call.1} parent=1 // pred_check_branch
      %12 = sbr.rel (0) target = $region5
    $region4: #{tpu_custom_call.1} parent=1 // pred_region
      %14 = vsyncadd [#allocation3], 0
      %s16 = sshll.u32 %s0, 4
      %s17 = int_to_ptr.hbm [resolvable:$true] %s16
      %s18 = sshll.u32 [#allocation2], 4
      %s19 = int_to_ptr.vmem [resolvable:$true] %s18
      %21 = dma.hbm_to_vmem [thread:$0]  %s17, 768, %s19, [#allocation3]
    $region5: #{tpu_custom_call.1} parent=1 // pred_fallthru
      _
    // Predicated region
    $region6: #{tpu_custom_call.1} parent=1 // pred_check
      _
    $region7: #{tpu_custom_call.1} parent=1 // pred_check_branch
      %23 = sbr.rel (0) target = $region9
    $region8: #{tpu_custom_call.1} parent=1 // pred_region
      %25 = vsyncadd [#allocation6], 0
      %s26 = sshll.u32 %s1, 4
      %s27 = int_to_ptr.hbm [resolvable:$true] %s26
      %s28 = sshll.u32 [#allocation5], 4
      %s29 = int_to_ptr.vmem [resolvable:$true] %s28
      %34 = dma.hbm_to_vmem [thread:$0]  %s27, 6144, %s29, [#allocation6], 64, 64, 4
    $region9: #{tpu_custom_call.1} parent=1 // pred_fallthru
      _
    // Predicated region
    $region10: #{tpu_custom_call.1} parent=1 // pred_check
      _
    $region11: #{tpu_custom_call.1} parent=1 // pred_check_branch
      %36 = sbr.rel (0) target = $region13
    $region12: #{tpu_custom_call.1} parent=1 // pred_region
      _
    $region13: #{tpu_custom_call.1} parent=1 // pred_fallthru
      _
    // Predicated region
    $region14: #{tpu_custom_call.1} parent=1 // pred_check
      _
    $region15: #{tpu_custom_call.1} parent=1 // pred_check_branch
      %38 = sbr.rel (0) target = $region17
    $region16: #{tpu_custom_call.1} parent=1 // pred_region
      %40 = dma.done [#allocation3], 768
    $region17: #{tpu_custom_call.1} parent=1 // pred_fallthru
      _
    // Predicated region
    $region18: #{tpu_custom_call.1} parent=1 // pred_check
      _
    $region19: #{tpu_custom_call.1} parent=1 // pred_check_branch
      %42 = sbr.rel (0) target = $region21
    $region20: #{tpu_custom_call.1} parent=1 // pred_region
      %44 = dma.done [#allocation6], 6144
    $region21: #{tpu_custom_call.1} parent=1 // pred_fallthru
      _
    %v45 = vld [vmem:[#allocation2] sm:$0xff]
    %v46 = vld [vmem:[#allocation2 + $0x8] sm:$0xff]
    %v47 = vld [vmem:[#allocation2 + $0x10] sm:$0xff]
    %v48 = vld [vmem:[#allocation2 + $0x18] sm:$0xff]
    %v49 = vld [vmem:[#allocation2 + $0x20] sm:$0xff]
    %v50 = vld [vmem:[#allocation2 + $0x28] sm:$0xff]
    %v51 = vpack.c.bf16 %v45, %v45
    %v52 = vpack.c.bf16 %v46, %v46
    %v53 = vpack.c.bf16 %v47, %v47
    %v54 = vpack.c.bf16 %v48, %v48
    %v55 = vpack.c.bf16 %v49, %v49
    %v56 = vpack.c.bf16 %v50, %v50
    %v57 = vld [vmem:[#allocation5] sm:$0xf]
    %v58 = vld [vmem:[#allocation5 + $0x4] sm:$0xf]
    %v59 = vld [vmem:[#allocation5 + $0x8] sm:$0xf]
    %v60 = vld [vmem:[#allocation5 + $0xc] sm:$0xf]
    %v61 = vld [vmem:[#allocation5 + $0x10] sm:$0xf]
    %v62 = vld [vmem:[#allocation5 + $0x14] sm:$0xf]
    %v63 = vld [vmem:[#allocation5 + $0x18] sm:$0xf]
    %v64 = vld [vmem:[#allocation5 + $0x1c] sm:$0xf]
    %v65 = vld [vmem:[#allocation5 + $0x20] sm:$0xf]
    %v66 = vld [vmem:[#allocation5 + $0x24] sm:$0xf]
    %v67 = vld [vmem:[#allocation5 + $0x28] sm:$0xf]
    %v68 = vld [vmem:[#allocation5 + $0x2c] sm:$0xf]
    %v69 = vld [vmem:[#allocation5 + $0x30] sm:$0xf]
    %v70 = vld [vmem:[#allocation5 + $0x34] sm:$0xf]
    %v71 = vld [vmem:[#allocation5 + $0x38] sm:$0xf]
    %v72 = vld [vmem:[#allocation5 + $0x3c] sm:$0xf]
    %v73 = vld [vmem:[#allocation5 + $0x40] sm:$0xf]
    %v74 = vld [vmem:[#allocation5 + $0x44] sm:$0xf]
    %v75 = vld [vmem:[#allocation5 + $0x48] sm:$0xf]
    %v76 = vld [vmem:[#allocation5 + $0x4c] sm:$0xf]
    %v77 = vld [vmem:[#allocation5 + $0x50] sm:$0xf]
    %v78 = vld [vmem:[#allocation5 + $0x54] sm:$0xf]
    %v79 = vld [vmem:[#allocation5 + $0x58] sm:$0xf]
    %v80 = vld [vmem:[#allocation5 + $0x5c] sm:$0xf]
    %v81 = vld [vmem:[#allocation5 + $0x60] sm:$0xf]
    %v82 = vld [vmem:[#allocation5 + $0x64] sm:$0xf]
    %v83 = vld [vmem:[#allocation5 + $0x68] sm:$0xf]
    %v84 = vld [vmem:[#allocation5 + $0x6c] sm:$0xf]
    %v85 = vld [vmem:[#allocation5 + $0x70] sm:$0xf]
    %v86 = vld [vmem:[#allocation5 + $0x74] sm:$0xf]
    %v87 = vld [vmem:[#allocation5 + $0x78] sm:$0xf]
    %v88 = vld [vmem:[#allocation5 + $0x7c] sm:$0xf]
    %v89 = vld [vmem:[#allocation5 + $0x80] sm:$0xf]
    %v90 = vld [vmem:[#allocation5 + $0x84] sm:$0xf]
    %v91 = vld [vmem:[#allocation5 + $0x88] sm:$0xf]
    %v92 = vld [vmem:[#allocation5 + $0x8c] sm:$0xf]
    %v93 = vld [vmem:[#allocation5 + $0x90] sm:$0xf]
    %v94 = vld [vmem:[#allocation5 + $0x94] sm:$0xf]
    %v95 = vld [vmem:[#allocation5 + $0x98] sm:$0xf]
    %v96 = vld [vmem:[#allocation5 + $0x9c] sm:$0xf]
    %v97 = vld [vmem:[#allocation5 + $0xa0] sm:$0xf]
    %v98 = vld [vmem:[#allocation5 + $0xa4] sm:$0xf]
    %v99 = vld [vmem:[#allocation5 + $0xa8] sm:$0xf]
    %v100 = vld [vmem:[#allocation5 + $0xac] sm:$0xf]
    %v101 = vld [vmem:[#allocation5 + $0xb0] sm:$0xf]
    %v102 = vld [vmem:[#allocation5 + $0xb4] sm:$0xf]
    %v103 = vld [vmem:[#allocation5 + $0xb8] sm:$0xf]
    %v104 = vld [vmem:[#allocation5 + $0xbc] sm:$0xf]
    %v105 = vld [vmem:[#allocation5 + $0xc0] sm:$0xf]
    %v106 = vld [vmem:[#allocation5 + $0xc4] sm:$0xf]
    %v107 = vld [vmem:[#allocation5 + $0xc8] sm:$0xf]
    %v108 = vld [vmem:[#allocation5 + $0xcc] sm:$0xf]
    %v109 = vld [vmem:[#allocation5 + $0xd0] sm:$0xf]
    %v110 = vld [vmem:[#allocation5 + $0xd4] sm:$0xf]
    %v111 = vld [vmem:[#allocation5 + $0xd8] sm:$0xf]
    %v112 = vld [vmem:[#allocation5 + $0xdc] sm:$0xf]
    %v113 = vld [vmem:[#allocation5 + $0xe0] sm:$0xf]
    %v114 = vld [vmem:[#allocation5 + $0xe4] sm:$0xf]
    %v115 = vld [vmem:[#allocation5 + $0xe8] sm:$0xf]
    %v116 = vld [vmem:[#allocation5 + $0xec] sm:$0xf]
    %v117 = vld [vmem:[#allocation5 + $0xf0] sm:$0xf]
    %v118 = vld [vmem:[#allocation5 + $0xf4] sm:$0xf]
    %v119 = vld [vmem:[#allocation5 + $0xf8] sm:$0xf]
    %v120 = vld [vmem:[#allocation5 + $0xfc] sm:$0xf]
    %v121 = vld [vmem:[#allocation5 + $0x100] sm:$0xf]
    %v122 = vld [vmem:[#allocation5 + $0x104] sm:$0xf]
    %v123 = vld [vmem:[#allocation5 + $0x108] sm:$0xf]
    %v124 = vld [vmem:[#allocation5 + $0x10c] sm:$0xf]
    %v125 = vld [vmem:[#allocation5 + $0x110] sm:$0xf]
    %v126 = vld [vmem:[#allocation5 + $0x114] sm:$0xf]
    %v127 = vld [vmem:[#allocation5 + $0x118] sm:$0xf]
    %v128 = vld [vmem:[#allocation5 + $0x11c] sm:$0xf]
    %v129 = vld [vmem:[#allocation5 + $0x120] sm:$0xf]
    %v130 = vld [vmem:[#allocation5 + $0x124] sm:$0xf]
    %v131 = vld [vmem:[#allocation5 + $0x128] sm:$0xf]
    %v132 = vld [vmem:[#allocation5 + $0x12c] sm:$0xf]
    %v133 = vld [vmem:[#allocation5 + $0x130] sm:$0xf]
    %v134 = vld [vmem:[#allocation5 + $0x134] sm:$0xf]
    %v135 = vld [vmem:[#allocation5 + $0x138] sm:$0xf]
    %v136 = vld [vmem:[#allocation5 + $0x13c] sm:$0xf]
    %v137 = vld [vmem:[#allocation5 + $0x140] sm:$0xf]
    %v138 = vld [vmem:[#allocation5 + $0x144] sm:$0xf]
    %v139 = vld [vmem:[#allocation5 + $0x148] sm:$0xf]
    %v140 = vld [vmem:[#allocation5 + $0x14c] sm:$0xf]
    %v141 = vld [vmem:[#allocation5 + $0x150] sm:$0xf]
    %v142 = vld [vmem:[#allocation5 + $0x154] sm:$0xf]
    %v143 = vld [vmem:[#allocation5 + $0x158] sm:$0xf]
    %v144 = vld [vmem:[#allocation5 + $0x15c] sm:$0xf]
    %v145 = vld [vmem:[#allocation5 + $0x160] sm:$0xf]
    %v146 = vld [vmem:[#allocation5 + $0x164] sm:$0xf]
    %v147 = vld [vmem:[#allocation5 + $0x168] sm:$0xf]
    %v148 = vld [vmem:[#allocation5 + $0x16c] sm:$0xf]
    %v149 = vld [vmem:[#allocation5 + $0x170] sm:$0xf]
    %v150 = vld [vmem:[#allocation5 + $0x174] sm:$0xf]
    %v151 = vld [vmem:[#allocation5 + $0x178] sm:$0xf]
    %v152 = vld [vmem:[#allocation5 + $0x17c] sm:$0xf]
    %v153 = vld [vmem:[%s2] sm:$0x1]
    %v155 = vperm.slane %v153, 0
    %v253 = vunpack.c.l.b16 %v57
    %v254 = vunpack.c.l.b16 %v58
    %v255 = vunpack.c.l.b16 %v59
    %v256 = vunpack.c.l.b16 %v60
    %v257 = vunpack.c.l.b16 %v61
    %v258 = vunpack.c.l.b16 %v62
    %v259 = vunpack.c.l.b16 %v63
    %v260 = vunpack.c.l.b16 %v64
    %v261 = vunpack.c.l.b16 %v65
    %v262 = vunpack.c.l.b16 %v66
    %v263 = vunpack.c.l.b16 %v67
    %v264 = vunpack.c.l.b16 %v68
    %v265 = vunpack.c.l.b16 %v69
    %v266 = vunpack.c.l.b16 %v70
    %v267 = vunpack.c.l.b16 %v71
    %v268 = vunpack.c.l.b16 %v72
    %v269 = vunpack.c.l.b16 %v73
    %v270 = vunpack.c.l.b16 %v74
    %v271 = vunpack.c.l.b16 %v75
    %v272 = vunpack.c.l.b16 %v76
    %v273 = vunpack.c.l.b16 %v77
    %v274 = vunpack.c.l.b16 %v78
    %v275 = vunpack.c.l.b16 %v79
    %v276 = vunpack.c.l.b16 %v80
    %v277 = vunpack.c.l.b16 %v81
    %v278 = vunpack.c.l.b16 %v82
    %v279 = vunpack.c.l.b16 %v83
    %v280 = vunpack.c.l.b16 %v84
    %v281 = vunpack.c.l.b16 %v85
    %v282 = vunpack.c.l.b16 %v86
    %v283 = vunpack.c.l.b16 %v87
    %v284 = vunpack.c.l.b16 %v88
    %v285 = vunpack.c.l.b16 %v89
    %v286 = vunpack.c.l.b16 %v90
    %v287 = vunpack.c.l.b16 %v91
    %v288 = vunpack.c.l.b16 %v92
    %v289 = vunpack.c.l.b16 %v93
    %v290 = vunpack.c.l.b16 %v94
    %v291 = vunpack.c.l.b16 %v95
    %v292 = vunpack.c.l.b16 %v96
    %v293 = vunpack.c.l.b16 %v97
    %v294 = vunpack.c.l.b16 %v98
    %v295 = vunpack.c.l.b16 %v99
    %v296 = vunpack.c.l.b16 %v100
    %v297 = vunpack.c.l.b16 %v101
    %v298 = vunpack.c.l.b16 %v102
    %v299 = vunpack.c.l.b16 %v103
    %v300 = vunpack.c.l.b16 %v104
    %v301 = vunpack.c.l.b16 %v105
    %v302 = vunpack.c.l.b16 %v106
    %v303 = vunpack.c.l.b16 %v107
    %v304 = vunpack.c.l.b16 %v108
    %v305 = vunpack.c.l.b16 %v109
    %v306 = vunpack.c.l.b16 %v110
    %v307 = vunpack.c.l.b16 %v111
    %v308 = vunpack.c.l.b16 %v112
    %v309 = vunpack.c.l.b16 %v113
    %v310 = vunpack.c.l.b16 %v114
    %v311 = vunpack.c.l.b16 %v115
    %v312 = vunpack.c.l.b16 %v116
    %v313 = vunpack.c.l.b16 %v117
    %v314 = vunpack.c.l.b16 %v118
    %v315 = vunpack.c.l.b16 %v119
    %v316 = vunpack.c.l.b16 %v120
    %v317 = vunpack.c.l.b16 %v121
    %v318 = vunpack.c.l.b16 %v122
    %v319 = vunpack.c.l.b16 %v123
    %v320 = vunpack.c.l.b16 %v124
    %v321 = vunpack.c.l.b16 %v125
    %v322 = vunpack.c.l.b16 %v126
    %v323 = vunpack.c.l.b16 %v127
    %v324 = vunpack.c.l.b16 %v128
    %v325 = vunpack.c.l.b16 %v129
    %v326 = vunpack.c.l.b16 %v130
    %v327 = vunpack.c.l.b16 %v131
    %v328 = vunpack.c.l.b16 %v132
    %v329 = vunpack.c.l.b16 %v133
    %v330 = vunpack.c.l.b16 %v134
    %v331 = vunpack.c.l.b16 %v135
    %v332 = vunpack.c.l.b16 %v136
    %v333 = vunpack.c.l.b16 %v137
    %v334 = vunpack.c.l.b16 %v138
    %v335 = vunpack.c.l.b16 %v139
    %v336 = vunpack.c.l.b16 %v140
    %v337 = vunpack.c.l.b16 %v141
    %v338 = vunpack.c.l.b16 %v142
    %v339 = vunpack.c.l.b16 %v143
    %v340 = vunpack.c.l.b16 %v144
    %v341 = vunpack.c.l.b16 %v145
    %v342 = vunpack.c.l.b16 %v146
    %v343 = vunpack.c.l.b16 %v147
    %v344 = vunpack.c.l.b16 %v148
    %v345 = vunpack.c.l.b16 %v149
    %v346 = vunpack.c.l.b16 %v150
    %v347 = vunpack.c.l.b16 %v151
    %v348 = vunpack.c.l.b16 %v152
    %v349 = vpack.c.b16 %v254, %v253
    %v350 = vpack.c.b16 %v256, %v255
    %v351 = vpack.c.b16 %v258, %v257
    %v352 = vpack.c.b16 %v260, %v259
    %v353 = vpack.c.b16 %v262, %v261
    %v354 = vpack.c.b16 %v264, %v263
    %v355 = vpack.c.b16 %v266, %v265
    %v356 = vpack.c.b16 %v268, %v267
    %v357 = vpack.c.b16 %v270, %v269
    %v358 = vpack.c.b16 %v272, %v271
    %v359 = vpack.c.b16 %v274, %v273
    %v360 = vpack.c.b16 %v276, %v275
    %v361 = vpack.c.b16 %v278, %v277
    %v362 = vpack.c.b16 %v280, %v279
    %v363 = vpack.c.b16 %v282, %v281
    %v364 = vpack.c.b16 %v284, %v283
    %v365 = vpack.c.b16 %v286, %v285
    %v366 = vpack.c.b16 %v288, %v287
    %v367 = vpack.c.b16 %v290, %v289
    %v368 = vpack.c.b16 %v292, %v291
    %v369 = vpack.c.b16 %v294, %v293
    %v370 = vpack.c.b16 %v296, %v295
    %v371 = vpack.c.b16 %v298, %v297
    %v372 = vpack.c.b16 %v300, %v299
    %v373 = vpack.c.b16 %v302, %v301
    %v374 = vpack.c.b16 %v304, %v303
    %v375 = vpack.c.b16 %v306, %v305
    %v376 = vpack.c.b16 %v308, %v307
    %v377 = vpack.c.b16 %v310, %v309
    %v378 = vpack.c.b16 %v312, %v311
    %v379 = vpack.c.b16 %v314, %v313
    %v380 = vpack.c.b16 %v316, %v315
    %v381 = vpack.c.b16 %v318, %v317
    %v382 = vpack.c.b16 %v320, %v319
    %v383 = vpack.c.b16 %v322, %v321
    %v384 = vpack.c.b16 %v324, %v323
    %v385 = vpack.c.b16 %v326, %v325
    %v386 = vpack.c.b16 %v328, %v327
    %v387 = vpack.c.b16 %v330, %v329
    %v388 = vpack.c.b16 %v332, %v331
    %v389 = vpack.c.b16 %v334, %v333
    %v390 = vpack.c.b16 %v336, %v335
    %v391 = vpack.c.b16 %v338, %v337
    %v392 = vpack.c.b16 %v340, %v339
    %v393 = vpack.c.b16 %v342, %v341
    %v394 = vpack.c.b16 %v344, %v343
    %v395 = vpack.c.b16 %v346, %v345
    %v396 = vpack.c.b16 %v348, %v347
    %445 = vmatpush.bf16.msra.mxu0 %v356
    %446 = vmatpush.bf16.msra.mxu0 %v355
    %447 = vmatpush.bf16.msra.mxu0 %v354
    %448 = vmatpush.bf16.msra.mxu0 %v353
    %449 = vmatpush.bf16.msra.mxu0 %v352
    %450 = vmatpush.bf16.msra.mxu0 %v351
    %451 = vmatpush.bf16.msra.mxu0 %v350
    %452 = vmatpush.bf16.msra.mxu0 %v349
    %453 = vmatmul.bf16.gmra.mxu0 %v51
    %v454 = vpop.f32.mrf.mxu0
    %v455 = vadd.f32 %v155, %v454
    %v456 = vpop.f32.mrf.mxu0
    %457 = vdwg.mxu0
    %458 = vmatpush.bf16.msra.mxu0 %v364
    %459 = vmatpush.bf16.msra.mxu0 %v363
    %460 = vmatpush.bf16.msra.mxu0 %v362
    %461 = vmatpush.bf16.msra.mxu0 %v361
    %462 = vmatpush.bf16.msra.mxu0 %v360
    %463 = vmatpush.bf16.msra.mxu0 %v359
    %464 = vmatpush.bf16.msra.mxu0 %v358
    %465 = vmatpush.bf16.msra.mxu0 %v357
    %466 = vmatmul.bf16.gmra.mxu0 %v52
    %v467 = vpop.f32.mrf.mxu0
    %v468 = vadd.f32 %v455, %v467
    %v469 = vpop.f32.mrf.mxu0
    %470 = vdwg.mxu0
    %471 = vmatpush.bf16.msra.mxu0 %v372
    %472 = vmatpush.bf16.msra.mxu0 %v371
    %473 = vmatpush.bf16.msra.mxu0 %v370
    %474 = vmatpush.bf16.msra.mxu0 %v369
    %475 = vmatpush.bf16.msra.mxu0 %v368
    %476 = vmatpush.bf16.msra.mxu0 %v367
    %477 = vmatpush.bf16.msra.mxu0 %v366
    %478 = vmatpush.bf16.msra.mxu0 %v365
    %479 = vmatmul.bf16.gmra.mxu0 %v53
    %v480 = vpop.f32.mrf.mxu0
    %v481 = vadd.f32 %v468, %v480
    %v482 = vpop.f32.mrf.mxu0
    %483 = vdwg.mxu0
    %484 = vmatpush.bf16.msra.mxu0 %v380
    %485 = vmatpush.bf16.msra.mxu0 %v379
    %486 = vmatpush.bf16.msra.mxu0 %v378
    %487 = vmatpush.bf16.msra.mxu0 %v377
    %488 = vmatpush.bf16.msra.mxu0 %v376
    %489 = vmatpush.bf16.msra.mxu0 %v375
    %490 = vmatpush.bf16.msra.mxu0 %v374
    %491 = vmatpush.bf16.msra.mxu0 %v373
    %492 = vmatmul.bf16.gmra.mxu0 %v54
    %v493 = vpop.f32.mrf.mxu0
    %v494 = vadd.f32 %v481, %v493
    %v495 = vpop.f32.mrf.mxu0
    %496 = vdwg.mxu0
    %497 = vmatpush.bf16.msra.mxu0 %v388
    %498 = vmatpush.bf16.msra.mxu0 %v387
    %499 = vmatpush.bf16.msra.mxu0 %v386
    %500 = vmatpush.bf16.msra.mxu0 %v385
    %501 = vmatpush.bf16.msra.mxu0 %v384
    %502 = vmatpush.bf16.msra.mxu0 %v383
    %503 = vmatpush.bf16.msra.mxu0 %v382
    %504 = vmatpush.bf16.msra.mxu0 %v381
    %505 = vmatmul.bf16.gmra.mxu0 %v55
    %v506 = vpop.f32.mrf.mxu0
    %v507 = vadd.f32 %v494, %v506
    %v508 = vpop.f32.mrf.mxu0
    %509 = vdwg.mxu0
    %510 = vmatpush.bf16.msra.mxu0 %v396
    %511 = vmatpush.bf16.msra.mxu0 %v395
    %512 = vmatpush.bf16.msra.mxu0 %v394
    %513 = vmatpush.bf16.msra.mxu0 %v393
    %514 = vmatpush.bf16.msra.mxu0 %v392
    %515 = vmatpush.bf16.msra.mxu0 %v391
    %516 = vmatpush.bf16.msra.mxu0 %v390
    %517 = vmatpush.bf16.msra.mxu0 %v389
    %518 = vmatmul.bf16.gmra.mxu0 %v56
    %v519 = vpop.f32.mrf.mxu0
    %v520 = vadd.f32 %v507, %v519
    %v521 = vpop.f32.mrf.mxu0
    %522 = vdwg.mxu0
    %v523 = vmax.f32 %v520, 0.0
    %524 = vst [vmem:[#allocation7] sm:$0xff] %v523
    // Predicated region
    $region22: #{tpu_custom_call.1} parent=1 // pred_check
      _
    $region23: #{tpu_custom_call.1} parent=1 // pred_check_branch
      %526 = sbr.rel (0) target = $region25
    $region24: #{tpu_custom_call.1} parent=1 // pred_region
      %528 = vsyncadd [#allocation4], 0
      %s530 = sshll.u32 [#allocation7], 4
      %s531 = int_to_ptr.vmem [resolvable:$true] %s530
      %s532 = sshll.u32 %s3, 4
      %s533 = int_to_ptr.hbm [resolvable:$true] %s532
      %535 = dma.vmem_to_hbm [thread:$0]  %s531, 128, %s533, [#allocation4]
    $region25: #{tpu_custom_call.1} parent=1 // pred_fallthru
      _
    // Predicated region
    $region26: #{tpu_custom_call.1} parent=1 // pred_check
      _
    $region27: #{tpu_custom_call.1} parent=1 // pred_check_branch
      %537 = sbr.rel (0) target = $region29
    $region28: #{tpu_custom_call.1} parent=1 // pred_region
      %539 = dma.done [#allocation4], 128
    $region29: #{tpu_custom_call.1} parent=1 // pred_fallthru
      _
    %540 = vsyncpa [#allocation3], 1
    %541 = vsyncpa [#allocation6], 1
    %542 = vsyncpa [#allocation4], 1

</llo_original>
